<compile_context>
chip_gen: v7x
topology: tpu7x:2x2x1
jax: 0.10.0
libtpu: 0.0.40
codegen_flags: <defaults>
</compile_context>

<pallas_src>
import functools
import math

import jax
import jax.numpy as jnp
import numpy as np
from jax.experimental import pallas as pl
from jax.experimental.pallas import tpu as pltpu


def _round_up(x: int, m: int) -> int:
    return (x + m - 1) // m * m


# ----------------------------------------------------------------------------
# Host-side constant construction (cached — off the per-call path).
# ----------------------------------------------------------------------------
@functools.lru_cache(maxsize=None)
def _dft_constants(seq_len: int, f_pad: int):
    """Stacked DFT matrices for ortho rfft/irfft along the seq axis.

    A    : (2*f_pad, S)  rows [0:F)          = real part of the rfft matrix
                         rows [f_pad:f_pad+F) = imag part, rest zero.
    Binv : (S, 2*f_pad)  columns laid out the same way for the irfft.
    For x (S, H):  stacked = A @ x  ->  [Xr ; Xi]  (each (f_pad, H))
                   y = Binv @ [Yr ; Yi]            (S, H)
    """
    F = seq_len // 2 + 1
    n = np.arange(seq_len)[None, :]                 # (1, S)
    k = np.arange(F)[:, None]                       # (F, 1)
    ang = 2.0 * np.pi * k * n / seq_len             # (F, S)
    scale = 1.0 / math.sqrt(seq_len)
    a_r = np.cos(ang) * scale                       # (F, S)
    a_i = -np.sin(ang) * scale                      # (F, S)
    # irfft multiplicity of each positive-frequency bin in the full spectrum.
    c = np.full((F, 1), 2.0)
    c[0] = 1.0
    if seq_len % 2 == 0:
        c[-1] = 1.0
    b_r = (a_r * c).T                               # (S, F)
    b_i = (a_i * c).T                               # (S, F)

    A = np.zeros((2 * f_pad, seq_len), np.float32)
    A[:F] = a_r
    A[f_pad:f_pad + F] = a_i
    Binv = np.zeros((seq_len, 2 * f_pad), np.float32)
    Binv[:, :F] = b_r
    Binv[:, f_pad:f_pad + F] = b_i
    return A, Binv


def _choose_block_batch(batch: int, seq_len: int, hidden: int,
                        target_bytes: int = 512 * 1024) -> int:
    """Samples per grid step: amortize per-step overhead, but keep grid >= 2
    when B > 1 (v7x: 2 TensorCores) and always divide B (no batch padding)."""
    if batch <= 1:
        return 1
    per_sample = seq_len * hidden * 4
    target = max(1, target_bytes // per_sample)
    cap = max(1, batch // 2)                 # guarantee grid >= 2
    limit = min(target, cap)
    best = 1
    for d in range(1, batch + 1):
        if batch % d == 0 and d <= limit:
            best = d
    return best


def _vmem_limit_bytes(bblk: int, seq_len: int, hidden: int, f_pad: int) -> int:
    """Generation-aware VMEM budget (v7x has 64 MiB physical vs 128 MiB)."""
    blk = bblk * seq_len * hidden * 4
    consts = (2 * (2 * f_pad) * seq_len + 2 * (2 * f_pad) * hidden
              + 2 * hidden) * 4
    live = 8 * (seq_len * hidden + 2 * f_pad * hidden) * 4   # per-sample temps
    need = 2 * 2 * blk + consts + live                       # dbl-buffered x/out
    cap = 64 * 1024 * 1024
    try:
        cap = int(getattr(pltpu.get_tpu_info(), "vmem_capacity_bytes", cap))
    except Exception:
        pass
    return int(min(max(4 * need, 8 * 1024 * 1024), cap * 3 // 4))


# ----------------------------------------------------------------------------
# Pallas kernel: one batch chunk (bblk samples) per grid step, natural layout.
# ----------------------------------------------------------------------------
def _freq_layer_kernel(x_ref, a_ref, binv_ref, w1_ref, w2_ref,
                       gamma_ref, beta_ref, out_ref,
                       *, f_pad, eps, bblk, inv_h):
    # Hoist grid-invariant constant loads out of the per-sample loop.
    a = a_ref[...]          # (2*f_pad, S)
    binv = binv_ref[...]    # (S, 2*f_pad)
    w1 = w1_ref[...]        # (2*f_pad, H)
    w2 = w2_ref[...]        # (2*f_pad, H)
    gamma = gamma_ref[...]  # (1, H)
    beta = beta_ref[...]    # (1, H)

    # Fully unrolled loop over the samples in this block (bblk is a small,
    # static int) -> independent MXU/VPU chains per grid step (ILP).
    for b in range(bblk):
        xb = x_ref[b]                                                 # (S, H)

        # rfft (ortho) along seq: ONE stacked matmul -> [Xr ; Xi].
        fwd = jnp.dot(a, xb, preferred_element_type=jnp.float32)     # (2Fp, H)

        # Complex multiply by weight**sqrt_beta via a sublane roll:
        #   [Yr ; Yi] = [Xr ; Xi] * [wr ; wr] + [Xi ; Xr] * [-wi ; wi]
        y_stk = fwd * w1 + pltpu.roll(fwd, shift=f_pad, axis=0) * w2

        # irfft back to (S, H): ONE stacked matmul.
        y = jnp.dot(binv, y_stk, preferred_element_type=jnp.float32)

        # TODO(synk): out_dropout is identity here (eval mode); no PRNG dropout.
        h = y + xb

        # LayerNorm over hidden (eps inside sqrt, biased variance) — plain
        # lane-axis reductions (XLU), no LN matmul matrix needed.
        mu = jnp.sum(h, axis=-1, keepdims=True) * inv_h
        d = h - mu
        var = jnp.sum(d * d, axis=-1, keepdims=True) * inv_h
        out_ref[b] = (d * jax.lax.rsqrt(var + eps) * gamma
                      + beta).astype(out_ref.dtype)


# ----------------------------------------------------------------------------
# Wrapper
# ----------------------------------------------------------------------------
def frequency_layer(input_tensor, complex_weight, gamma, beta,
                    sqrt_beta: float, eps: float = 1e-12,
                    block_batch: int | None = None):
    """input_tensor: (B, S, H) float32.
       complex_weight: (1, S//2+1, H, 2) float32 (real/imag in last dim)."""
    B, S, H = input_tensor.shape
    F = S // 2 + 1
    f_pad = _round_up(F, 8)

    bblk = _choose_block_batch(B, S, H) if block_batch is None else block_batch
    assert B % bblk == 0, "block_batch must divide batch"
    grid = B // bblk

    A_np, Binv_np = _dft_constants(S, f_pad)              # cached host constants

    # weight ** sqrt_beta (complex power), pre-stacked as W1=[wr;wr],
    # W2=[-wi;wi] for the in-kernel roll-based complex multiply.
    # TODO(synk): in a real module this is computed once at parameter-load time.
    w = (complex_weight[0, :, :, 0]
         + 1j * complex_weight[0, :, :, 1]).astype(jnp.complex64)     # (F, H)
    w_pow = w ** sqrt_beta
    wr = jnp.real(w_pow).astype(jnp.float32)
    wi = jnp.imag(w_pow).astype(jnp.float32)
    W1 = (jnp.zeros((2 * f_pad, H), jnp.float32)
          .at[:F].set(wr).at[f_pad:f_pad + F].set(wr))
    W2 = (jnp.zeros((2 * f_pad, H), jnp.float32)
          .at[:F].set(-wi).at[f_pad:f_pad + F].set(wi))

    gamma2 = gamma.reshape(1, H).astype(jnp.float32)
    beta2 = beta.reshape(1, H).astype(jnp.float32)
    x32 = input_tensor.astype(jnp.float32)                 # natural (B, S, H)

    kernel = functools.partial(_freq_layer_kernel, f_pad=f_pad, eps=eps,
                               bblk=bblk, inv_h=1.0 / H)

    const_spec = lambda shape: pl.BlockSpec(                # grid-invariant,
        shape, lambda i: (0, 0), pipeline_mode=pl.Buffered(1))  # single-buffered

    out = pl.pallas_call(
        kernel,
        out_shape=jax.ShapeDtypeStruct((B, S, H), jnp.float32),
        grid_spec=pltpu.PrefetchScalarGridSpec(
            num_scalar_prefetch=0,
            grid=(grid,),
            in_specs=[
                pl.BlockSpec((bblk, S, H), lambda i: (i, 0, 0)),   # x chunk
                const_spec((2 * f_pad, S)),                        # A  (rfft)
                const_spec((S, 2 * f_pad)),                        # Binv (irfft)
                const_spec((2 * f_pad, H)),                        # W1
                const_spec((2 * f_pad, H)),                        # W2
                const_spec((1, H)),                                # gamma
                const_spec((1, H)),                                # beta
            ],
            out_specs=pl.BlockSpec((bblk, S, H), lambda i: (i, 0, 0)),
        ),
        compiler_params=pltpu.CompilerParams(
            dimension_semantics=("parallel",),
            vmem_limit_bytes=_vmem_limit_bytes(bblk, S, H, f_pad),
        ),
    )(x32, jnp.asarray(A_np), jnp.asarray(Binv_np), W1, W2, gamma2, beta2)

    return out


# ----------------------------------------------------------------------------
# Pure-JAX reference (mirrors the PyTorch forward) for a correctness check.
# ----------------------------------------------------------------------------
def frequency_layer_ref(input_tensor, complex_weight, gamma, beta,
                        sqrt_beta: float, eps: float = 1e-12):
    B, S, H = input_tensor.shape
    x = jnp.fft.rfft(input_tensor, axis=1, norm="ortho")
    w = complex_weight[..., 0] + 1j * complex_weight[..., 1]            # (1,F,H)
    x = x * (w ** sqrt_beta)
    y = jnp.fft.irfft(x, n=S, axis=1, norm="ortho")
    h = y + input_tensor
    mu = jnp.mean(h, axis=-1, keepdims=True)
    var = jnp.mean((h - mu) ** 2, axis=-1, keepdims=True)
    return (h - mu) / jnp.sqrt(var + eps) * gamma + beta


if __name__ == "__main__":
    # Small shapes consistent with the module: batch=2, max_seq_length=8, hidden=32.
    B, S, H = 2, 8, 32
    sqrt_beta = 0.7

    key = jax.random.PRNGKey(0)
    k_x, k_w = jax.random.split(key)

    x = jax.random.normal(k_x, (B, S, H), dtype=jnp.float32)
    complex_weight = jax.random.normal(
        k_w, (1, S // 2 + 1, H, 2), dtype=jnp.float32) * 0.02
    gamma = jnp.ones((H,), jnp.float32)   # LayerNorm weight
    beta = jnp.zeros((H,), jnp.float32)   # LayerNorm bias

    out = jax.block_until_ready(
        frequency_layer(x, complex_weight, gamma, beta, sqrt_beta))
    ref = frequency_layer_ref(x, complex_weight, gamma, beta, sqrt_beta)
    np.testing.assert_allclose(np.asarray(out), np.asarray(ref),
                               rtol=1e-4, atol=1e-4)

    # Second small config exercising bblk > 1 (unrolled multi-sample path).
    B2, S2, H2 = 4, 16, 32
    x2 = jax.random.normal(jax.random.PRNGKey(1), (B2, S2, H2), jnp.float32)
    w2 = jax.random.normal(
        jax.random.PRNGKey(2), (1, S2 // 2 + 1, H2, 2), jnp.float32) * 0.02
    out2 = jax.block_until_ready(
        frequency_layer(x2, w2, gamma, beta, sqrt_beta))
    ref2 = frequency_layer_ref(x2, w2, gamma, beta, sqrt_beta)
    np.testing.assert_allclose(np.asarray(out2), np.asarray(ref2),
                               rtol=1e-4, atol=1e-4)

    print("KERNEL_OK")
</pallas_src>

<mosaic_0001>
module attributes {stable_mosaic.version = 11 : i64} {
  func.func @_freq_layer_kernel(%arg0: i32, %arg1: memref<1x8x32xf32, #tpu.memory_space<vmem>>, %arg2: memref<16x8xf32, #tpu.memory_space<vmem>>, %arg3: memref<8x16xf32, #tpu.memory_space<vmem>>, %arg4: memref<16x32xf32, #tpu.memory_space<vmem>>, %arg5: memref<16x32xf32, #tpu.memory_space<vmem>>, %arg6: memref<1x32xf32, #tpu.memory_space<vmem>>, %arg7: memref<1x32xf32, #tpu.memory_space<vmem>>, %arg8: memref<1x8x32xf32, #tpu.memory_space<vmem>>) attributes {dimension_semantics = [#tpu.dimension_semantics<parallel>], iteration_bounds = array<i64: 2>, scalar_prefetch = 0 : i64, scratch_operands = 0 : i64, tpu.core_type = #tpu.core_type<tc>, window_params = [{transform_indices = @transform_0, window_bounds = array<i64: 1, 8, 32>}, {pipeline_mode = #tpu.pipeline_mode<synchronous>, transform_indices = @transform_1, window_bounds = array<i64: 16, 8>}, {pipeline_mode = #tpu.pipeline_mode<synchronous>, transform_indices = @transform_2, window_bounds = array<i64: 8, 16>}, {pipeline_mode = #tpu.pipeline_mode<synchronous>, transform_indices = @transform_3, window_bounds = array<i64: 16, 32>}, {pipeline_mode = #tpu.pipeline_mode<synchronous>, transform_indices = @transform_4, window_bounds = array<i64: 16, 32>}, {pipeline_mode = #tpu.pipeline_mode<synchronous>, transform_indices = @transform_5, window_bounds = array<i64: 1, 32>}, {pipeline_mode = #tpu.pipeline_mode<synchronous>, transform_indices = @transform_6, window_bounds = array<i64: 1, 32>}, {transform_indices = @transform_7, window_bounds = array<i64: 1, 8, 32>}]} {
    %c0 = arith.constant 0 : index
    %c0_0 = arith.constant 0 : index
    %0 = vector.load %arg2[%c0, %c0_0] : memref<16x8xf32, #tpu.memory_space<vmem>>, vector<16x8xf32>
    %c0_1 = arith.constant 0 : index
    %c0_2 = arith.constant 0 : index
    %1 = vector.load %arg3[%c0_1, %c0_2] : memref<8x16xf32, #tpu.memory_space<vmem>>, vector<8x16xf32>
    %c0_3 = arith.constant 0 : index
    %c0_4 = arith.constant 0 : index
    %2 = vector.load %arg4[%c0_3, %c0_4] : memref<16x32xf32, #tpu.memory_space<vmem>>, vector<16x32xf32>
    %c0_5 = arith.constant 0 : index
    %c0_6 = arith.constant 0 : index
    %3 = vector.load %arg5[%c0_5, %c0_6] : memref<16x32xf32, #tpu.memory_space<vmem>>, vector<16x32xf32>
    %c0_7 = arith.constant 0 : index
    %c0_8 = arith.constant 0 : index
    %4 = vector.load %arg6[%c0_7, %c0_8] : memref<1x32xf32, #tpu.memory_space<vmem>>, vector<1x32xf32>
    %c0_9 = arith.constant 0 : index
    %c0_10 = arith.constant 0 : index
    %5 = vector.load %arg7[%c0_9, %c0_10] : memref<1x32xf32, #tpu.memory_space<vmem>>, vector<1x32xf32>
    %c0_11 = arith.constant 0 : index
    %c0_12 = arith.constant 0 : index
    %c0_13 = arith.constant 0 : index
    %6 = vector.load %arg1[%c0_11, %c0_12, %c0_13] : memref<1x8x32xf32, #tpu.memory_space<vmem>>, vector<1x8x32xf32>
    %7 = vector.shape_cast %6 : vector<1x8x32xf32> to vector<8x32xf32>
    %cst = arith.constant dense<0.000000e+00> : vector<16x32xf32>
    %8 = tpu.matmul %0, %7, %cst {dimension_numbers = #tpu.dot_dimension_numbers<[1], [0], [0], [1], [0, 0, 1, 1], [], []>} : vector<16x8xf32>, vector<8x32xf32>, vector<16x32xf32> -> vector<16x32xf32>
    %9 = arith.mulf %8, %2 : vector<16x32xf32>
    %c8_i32 = arith.constant 8 : i32
    %10 = tpu.dynamic_rotate %8 by %c8_i32 dim 0 : vector<16x32xf32>, i32 -> vector<16x32xf32>
    %11 = arith.mulf %10, %3 : vector<16x32xf32>
    %12 = arith.addf %9, %11 : vector<16x32xf32>
    %cst_14 = arith.constant dense<0.000000e+00> : vector<8x32xf32>
    %13 = tpu.matmul %1, %12, %cst_14 {dimension_numbers = #tpu.dot_dimension_numbers<[1], [0], [0], [1], [0, 0, 1, 1], [], []>} : vector<8x16xf32>, vector<16x32xf32>, vector<8x32xf32> -> vector<8x32xf32>
    %14 = arith.addf %13, %7 : vector<8x32xf32>
    %cst_15 = arith.constant dense<0.000000e+00> : vector<8xf32>
    %15 = vector.multi_reduction <add>, %14, %cst_15 [1] : vector<8x32xf32> to vector<8xf32>
    %16 = vector.shape_cast %15 : vector<8xf32> to vector<8x1xf32>
    %cst_16 = arith.constant 3.125000e-02 : f32
    %17 = vector.broadcast %cst_16 : f32 to vector<8x1xf32>
    %18 = arith.mulf %16, %17 : vector<8x1xf32>
    %19 = vector.broadcast %18 : vector<8x1xf32> to vector<8x32xf32>
    %20 = arith.subf %14, %19 : vector<8x32xf32>
    %21 = arith.mulf %20, %20 : vector<8x32xf32>
    %cst_17 = arith.constant dense<0.000000e+00> : vector<8xf32>
    %22 = vector.multi_reduction <add>, %21, %cst_17 [1] : vector<8x32xf32> to vector<8xf32>
    %23 = vector.shape_cast %22 : vector<8xf32> to vector<8x1xf32>
    %cst_18 = arith.constant 3.125000e-02 : f32
    %24 = vector.broadcast %cst_18 : f32 to vector<8x1xf32>
    %25 = arith.mulf %23, %24 : vector<8x1xf32>
    %cst_19 = arith.constant 9.99999996E-13 : f32
    %26 = vector.broadcast %cst_19 : f32 to vector<8x1xf32>
    %27 = arith.addf %25, %26 : vector<8x1xf32>
    %28 = math.rsqrt %27 : vector<8x1xf32>
    %29 = vector.broadcast %28 : vector<8x1xf32> to vector<8x32xf32>
    %30 = arith.mulf %20, %29 : vector<8x32xf32>
    %31 = vector.broadcast %4 : vector<1x32xf32> to vector<8x32xf32>
    %32 = arith.mulf %30, %31 : vector<8x32xf32>
    %33 = vector.broadcast %5 : vector<1x32xf32> to vector<8x32xf32>
    %34 = arith.addf %32, %33 : vector<8x32xf32>
    %c0_20 = arith.constant 0 : index
    %c0_21 = arith.constant 0 : index
    %c0_22 = arith.constant 0 : index
    %35 = vector.load %arg8[%c0_20, %c0_21, %c0_22] : memref<1x8x32xf32, #tpu.memory_space<vmem>>, vector<1x8x32xf32>
    %36 = vector.shape_cast %35 : vector<1x8x32xf32> to vector<8x32xf32>
    %37 = vector.shape_cast %34 : vector<8x32xf32> to vector<1x8x32xf32>
    tpu.vector_store %arg8[%c0_20, %c0_21, %c0_22], %37 {strides = array<i32>} : memref<1x8x32xf32, #tpu.memory_space<vmem>>, vector<1x8x32xf32>,
    return
  }
  func.func @transform_0(%arg0: i32) -> (i32, i32, i32) {
    %c0_i32 = arith.constant 0 : i32
    %c0_i32_0 = arith.constant 0 : i32
    %c0_i32_1 = arith.constant 0 : i32
    return %arg0, %c0_i32, %c0_i32_0 : i32, i32, i32
  }
  func.func @transform_1(%arg0: i32) -> (i32, i32) {
    %c0_i32 = arith.constant 0 : i32
    %c0_i32_0 = arith.constant 0 : i32
    %c0_i32_1 = arith.constant 0 : i32
    return %c0_i32, %c0_i32_0 : i32, i32
  }
  func.func @transform_2(%arg0: i32) -> (i32, i32) {
    %c0_i32 = arith.constant 0 : i32
    %c0_i32_0 = arith.constant 0 : i32
    %c0_i32_1 = arith.constant 0 : i32
    return %c0_i32, %c0_i32_0 : i32, i32
  }
  func.func @transform_3(%arg0: i32) -> (i32, i32) {
    %c0_i32 = arith.constant 0 : i32
    %c0_i32_0 = arith.constant 0 : i32
    %c0_i32_1 = arith.constant 0 : i32
    return %c0_i32, %c0_i32_0 : i32, i32
  }
  func.func @transform_4(%arg0: i32) -> (i32, i32) {
    %c0_i32 = arith.constant 0 : i32
    %c0_i32_0 = arith.constant 0 : i32
    %c0_i32_1 = arith.constant 0 : i32
    return %c0_i32, %c0_i32_0 : i32, i32
  }
  func.func @transform_5(%arg0: i32) -> (i32, i32) {
    %c0_i32 = arith.constant 0 : i32
    %c0_i32_0 = arith.constant 0 : i32
    %c0_i32_1 = arith.constant 0 : i32
    return %c0_i32, %c0_i32_0 : i32, i32
  }
  func.func @transform_6(%arg0: i32) -> (i32, i32) {
    %c0_i32 = arith.constant 0 : i32
    %c0_i32_0 = arith.constant 0 : i32
    %c0_i32_1 = arith.constant 0 : i32
    return %c0_i32, %c0_i32_0 : i32, i32
  }
  func.func @transform_7(%arg0: i32) -> (i32, i32, i32) {
    %c0_i32 = arith.constant 0 : i32
    %c0_i32_0 = arith.constant 0 : i32
    %c0_i32_1 = arith.constant 0 : i32
    return %arg0, %c0_i32, %c0_i32_0 : i32, i32, i32
  }
}

</mosaic_0001>

<llo_original>
// kernel: tpu_custom_call.1
$region0: #{tpu_custom_call.1}
  #allocation0 [shape = 'u32[]', space=smem, size = 0x4, offset = 0x4, fixed_abs, tag = 'smem constant byte address 0x4 - core index']
  #allocation1 [shape = 'u32[144,128]{1,0:T(1,128)}', space=vmem, size = 0x12000, scoped, tag = 'internal scratch']
  %s0 = inlined_call_operand.vmem [shape: f32[2,8,32], index: 0, kind: input, shape index: {}]
  %s1 = inlined_call_operand.vmem [shape: f32[16,8], index: 1, kind: input, shape index: {}]
  %s2 = inlined_call_operand.hbm [shape: f32[8,16], index: 2, kind: input, shape index: {}]
  %s3 = inlined_call_operand.vmem [shape: f32[16,32], index: 3, kind: input, shape index: {}]
  %s4 = inlined_call_operand.hbm [shape: f32[16,32], index: 4, kind: input, shape index: {}]
  %s5 = inlined_call_operand.vmem [shape: f32[1,32], index: 5, kind: input, shape index: {}]
  %s6 = inlined_call_operand.vmem [shape: f32[1,32], index: 6, kind: input, shape index: {}]
  %s7 = inlined_call_operand.hbm [shape: f32[2,8,32], index: 7, kind: output, shape index: {}]
  %s8 = sld [smem:[#allocation0]]
  $region69: #{tpu_custom_call.1} parent=0
    _
  %s10 = ssub.s32 1, %s8
  %s11 = scalar_select 0, %s10, %s8
  $region1: #{tpu_custom_call.1} parent=0
    #allocation2 [shape = 'u8[4096]{0}', space=vmem, size = 0x1000, scoped, tag = 'input window, operand 2, single buffered']
    #allocation3 [shape = 's32[2]{0}', space=sflag, size = 0x8, scoped, tag = 'scoped memory for tpu_custom_call.1']
    #allocation4 [shape = 's32[2]{0}', space=sflag, size = 0x8, scoped, tag = 'scoped memory for tpu_custom_call.1']
    #allocation5 [shape = 'u8[8192]{0}', space=vmem, size = 0x2000, scoped, tag = 'input window, operand 4, single buffered']
    #allocation6 [shape = 's32[1]{0}', space=sflag, size = 0x4, scoped, tag = 'scoped memory for tpu_custom_call.1']
    #allocation7 [shape = 'u8[8192]{0}', space=vmem, size = 0x2000, scoped, tag = 'output window, operand 0']
    %12 = vsyncpa [#allocation3], 0
    %13 = vsyncpa [#allocation6], 0
    %14 = vsyncpa [#allocation4], 0
    %s15 = scalar_lea.sflag [#allocation4], 1
    %16 = vsyncpa %s15, 0
    loop: start=0, step=1, limit=4
    $region2: #{tpu_custom_call.1} parent=1 // loop_pre_header
      _
    $region3: #{tpu_custom_call.1} parent=1 // loop_header
      %s18 = sphi 0, %s22
      %p19 = scmp.ge.s32.totalorder %s18, 4
      %s28 = sphi 0, %s30
      %s31 = sphi 0, %s28
      %s32 = sphi 0, %s31
      %s48 = sphi 0, %s32
      %s52 = sphi 0, %s52
      %s54 = sphi 0, %s52
      %s55 = sphi 0, %s54
      %s69 = sphi 0, %s55
      %s73 = sphi 0, %s73
      %s75 = sphi 0, %s73
      %s76 = sphi 0, %s75
      %s90 = sphi 0, %s76
      %s94 = sphi 0, %s94
      %s96 = sphi 0, %s94
      %s97 = sphi 0, %s96
      %s111 = sphi 0, %s97
      %s115 = sphi 0, %s115
      %s117 = sphi 0, %s115
      %s118 = sphi 0, %s117
      %s132 = sphi 0, %s118
      %s136 = sphi 0, %s136
      %s138 = sphi 0, %s136
      %s139 = sphi 0, %s138
      %s153 = sphi 0, %s139
      %s157 = sphi 0, %s157
      %s159 = sphi 0, %s157
      %s160 = sphi 0, %s159
      %s174 = sphi 0, %s160
      %s180 = sphi 0, %s182
      %s183 = sphi 0, %s180
      %s184 = sphi 0, %s183
      %s200 = sphi 0, %s184
    $region4: #{tpu_custom_call.1} parent=1 // loop_header_branch
      %21 = sbr.rel (%p19) target = $region8
    $region5: #{tpu_custom_call.1} parent=1 // loop_body
      %s23 = ssub.s32 %s18, 1
      %s24 = ssub.s32 %s18, 2
      %s25 = sadd.s32 %s18, 1
      %s26 = ssub.s32 %s18, %s25
      %p27 = scmp.eq.s32.totalorder %s26, 0
      %s29 = sadd.s32 %s28, 1
      %s30 = scalar_select %p27, %s28, %s29
      %p33 = pneg %p27
      %p34 = scmp.eq.s32.totalorder %s18, 1
      %p35 = por %p33, %p34
      %p36 = scmp.ne.s32.totalorder %s28, %s31
      %p37 = scmp.eq.s32.totalorder %s18, 0
      %p38 = por %p36, %p37
      %p39 = scmp.ne.s32.totalorder %s28, %s31
      %p40 = scmp.eq.s32.totalorder %s23, 1
      %p41 = por %p39, %p40
      %p42 = scmp.ne.s32.totalorder %s31, %s32
      %p43 = scmp.eq.s32.totalorder %s23, 0
      %p44 = por %p42, %p43
      %p45 = scmp.ne.s32.totalorder %s31, %s32
      %p46 = scmp.eq.s32.totalorder %s24, 1
      %p47 = por %p45, %p46
      %p49 = scmp.ne.s32.totalorder %s32, %s48
      %p50 = scmp.eq.s32.totalorder %s24, 0
      %p51 = por %p49, %p50
      %s53 = sadd.s32 %s52, 1
      %p56 = scmp.eq.s32.totalorder %s18, 1
      %p57 = scmp.ne.s32.totalorder %s52, %s54
      %p58 = scmp.eq.s32.totalorder %s18, 0
      %p59 = por %p57, %p58
      %p60 = scmp.ne.s32.totalorder %s52, %s54
      %p61 = scmp.eq.s32.totalorder %s23, 1
      %p62 = por %p60, %p61
      %p63 = scmp.ne.s32.totalorder %s54, %s55
      %p64 = scmp.eq.s32.totalorder %s23, 0
      %p65 = por %p63, %p64
      %p66 = scmp.ne.s32.totalorder %s54, %s55
      %p67 = scmp.eq.s32.totalorder %s24, 1
      %p68 = por %p66, %p67
      %p70 = scmp.ne.s32.totalorder %s55, %s69
      %p71 = scmp.eq.s32.totalorder %s24, 0
      %p72 = por %p70, %p71
      %s74 = sadd.s32 %s73, 1
      %p77 = scmp.eq.s32.totalorder %s18, 1
      %p78 = scmp.ne.s32.totalorder %s73, %s75
      %p79 = scmp.eq.s32.totalorder %s18, 0
      %p80 = por %p78, %p79
      %p81 = scmp.ne.s32.totalorder %s73, %s75
      %p82 = scmp.eq.s32.totalorder %s23, 1
      %p83 = por %p81, %p82
      %p84 = scmp.ne.s32.totalorder %s75, %s76
      %p85 = scmp.eq.s32.totalorder %s23, 0
      %p86 = por %p84, %p85
      %p87 = scmp.ne.s32.totalorder %s75, %s76
      %p88 = scmp.eq.s32.totalorder %s24, 1
      %p89 = por %p87, %p88
      %p91 = scmp.ne.s32.totalorder %s76, %s90
      %p92 = scmp.eq.s32.totalorder %s24, 0
      %p93 = por %p91, %p92
      %s95 = sadd.s32 %s94, 1
      %p98 = scmp.eq.s32.totalorder %s18, 1
      %p99 = scmp.ne.s32.totalorder %s94, %s96
      %p100 = scmp.eq.s32.totalorder %s18, 0
      %p101 = por %p99, %p100
      %p102 = scmp.ne.s32.totalorder %s94, %s96
      %p103 = scmp.eq.s32.totalorder %s23, 1
      %p104 = por %p102, %p103
      %p105 = scmp.ne.s32.totalorder %s96, %s97
      %p106 = scmp.eq.s32.totalorder %s23, 0
      %p107 = por %p105, %p106
      %p108 = scmp.ne.s32.totalorder %s96, %s97
      %p109 = scmp.eq.s32.totalorder %s24, 1
      %p110 = por %p108, %p109
      %p112 = scmp.ne.s32.totalorder %s97, %s111
      %p113 = scmp.eq.s32.totalorder %s24, 0
      %p114 = por %p112, %p113
      %s116 = sadd.s32 %s115, 1
      %p119 = scmp.eq.s32.totalorder %s18, 1
      %p120 = scmp.ne.s32.totalorder %s115, %s117
      %p121 = scmp.eq.s32.totalorder %s18, 0
      %p122 = por %p120, %p121
      %p123 = scmp.ne.s32.totalorder %s115, %s117
      %p124 = scmp.eq.s32.totalorder %s23, 1
      %p125 = por %p123, %p124
      %p126 = scmp.ne.s32.totalorder %s117, %s118
      %p127 = scmp.eq.s32.totalorder %s23, 0
      %p128 = por %p126, %p127
      %p129 = scmp.ne.s32.totalorder %s117, %s118
      %p130 = scmp.eq.s32.totalorder %s24, 1
      %p131 = por %p129, %p130
      %p133 = scmp.ne.s32.totalorder %s118, %s132
      %p134 = scmp.eq.s32.totalorder %s24, 0
      %p135 = por %p133, %p134
      %s137 = sadd.s32 %s136, 1
      %p140 = scmp.eq.s32.totalorder %s18, 1
      %p141 = scmp.ne.s32.totalorder %s136, %s138
      %p142 = scmp.eq.s32.totalorder %s18, 0
      %p143 = por %p141, %p142
      %p144 = scmp.ne.s32.totalorder %s136, %s138
      %p145 = scmp.eq.s32.totalorder %s23, 1
      %p146 = por %p144, %p145
      %p147 = scmp.ne.s32.totalorder %s138, %s139
      %p148 = scmp.eq.s32.totalorder %s23, 0
      %p149 = por %p147, %p148
      %p150 = scmp.ne.s32.totalorder %s138, %s139
      %p151 = scmp.eq.s32.totalorder %s24, 1
      %p152 = por %p150, %p151
      %p154 = scmp.ne.s32.totalorder %s139, %s153
      %p155 = scmp.eq.s32.totalorder %s24, 0
      %p156 = por %p154, %p155
      %s158 = sadd.s32 %s157, 1
      %p161 = scmp.eq.s32.totalorder %s18, 1
      %p162 = scmp.ne.s32.totalorder %s157, %s159
      %p163 = scmp.eq.s32.totalorder %s18, 0
      %p164 = por %p162, %p163
      %p165 = scmp.ne.s32.totalorder %s157, %s159
      %p166 = scmp.eq.s32.totalorder %s23, 1
      %p167 = por %p165, %p166
      %p168 = scmp.ne.s32.totalorder %s159, %s160
      %p169 = scmp.eq.s32.totalorder %s23, 0
      %p170 = por %p168, %p169
      %p171 = scmp.ne.s32.totalorder %s159, %s160
      %p172 = scmp.eq.s32.totalorder %s24, 1
      %p173 = por %p171, %p172
      %p175 = scmp.ne.s32.totalorder %s160, %s174
      %p176 = scmp.eq.s32.totalorder %s24, 0
      %p177 = por %p175, %p176
      %s178 = ssub.s32 %s18, %s25
      %p179 = scmp.eq.s32.totalorder %s178, 0
      %s181 = sadd.s32 %s180, 1
      %s182 = scalar_select %p179, %s180, %s181
      %p185 = pneg %p179
      %p186 = scmp.eq.s32.totalorder %s18, 1
      %p187 = por %p185, %p186
      %p188 = scmp.ne.s32.totalorder %s180, %s183
      %p189 = scmp.eq.s32.totalorder %s18, 0
      %p190 = por %p188, %p189
      %p191 = scmp.ne.s32.totalorder %s180, %s183
      %p192 = scmp.eq.s32.totalorder %s23, 1
      %p193 = por %p191, %p192
      %p194 = scmp.ne.s32.totalorder %s183, %s184
      %p195 = scmp.eq.s32.totalorder %s23, 0
      %p196 = por %p194, %p195
      %p197 = scmp.ne.s32.totalorder %s183, %s184
      %p198 = scmp.eq.s32.totalorder %s24, 1
      %p199 = por %p197, %p198
      %p201 = scmp.ne.s32.totalorder %s184, %s200
      %p202 = scmp.eq.s32.totalorder %s24, 0
      %p203 = por %p201, %p202
      %p204 = scmp.le.s32.totalorder 1, %s18
      %p205 = scmp.lt.s32.totalorder %s18, 3
      %p206 = pnand %p204, %p205
      %p207 = pneg %p206
      // Predicated region
      $region9: #{tpu_custom_call.1} parent=5 // pred_check
        _
      $region10: #{tpu_custom_call.1} parent=5 // pred_check_branch
        %209 = sbr.rel (%p206) target = $region12
      $region11: #{tpu_custom_call.1} parent=5 // pred_region
        %s210 = ssub.s32 %s18, 1
        // Predicated region
        $region13: #{tpu_custom_call.1} parent=11 // pred_check
          %p211 = pneg %p65
        $region14: #{tpu_custom_call.1} parent=11 // pred_check_branch
          %213 = sbr.rel (%p211) target = $region16
        $region15: #{tpu_custom_call.1} parent=11 // pred_region
          _
        $region16: #{tpu_custom_call.1} parent=11 // pred_fallthru
          _
        // Predicated region
        $region17: #{tpu_custom_call.1} parent=11 // pred_check
          %p214 = pneg %p86
        $region18: #{tpu_custom_call.1} parent=11 // pred_check_branch
          %216 = sbr.rel (%p214) target = $region20
        $region19: #{tpu_custom_call.1} parent=11 // pred_region
          %s218 = ssub.s32 128, 128
          %219 = vsyncadd [#allocation3], %s218
          %s221 = sshll.u32 [#allocation2], 4
          %s222 = int_to_ptr.vmem [resolvable:$true] %s221
          %224 = dma.hbm_to_vmem [thread:$0]  %s2, 128, %s222, [#allocation3]
        $region20: #{tpu_custom_call.1} parent=11 // pred_fallthru
          _
        // Predicated region
        $region21: #{tpu_custom_call.1} parent=11 // pred_check
          %p225 = pneg %p107
        $region22: #{tpu_custom_call.1} parent=11 // pred_check_branch
          %227 = sbr.rel (%p225) target = $region24
        $region23: #{tpu_custom_call.1} parent=11 // pred_region
          _
        $region24: #{tpu_custom_call.1} parent=11 // pred_fallthru
          _
        // Predicated region
        $region25: #{tpu_custom_call.1} parent=11 // pred_check
          %p228 = pneg %p128
        $region26: #{tpu_custom_call.1} parent=11 // pred_check_branch
          %230 = sbr.rel (%p228) target = $region28
        $region27: #{tpu_custom_call.1} parent=11 // pred_region
          %s232 = ssub.s32 256, 256
          %233 = vsyncadd [#allocation6], %s232
          %s234 = sshll.u32 [#allocation5], 4
          %s235 = int_to_ptr.vmem [resolvable:$true] %s234
          %240 = dma.hbm_to_vmem [thread:$0]  %s4, 256, %s235, [#allocation6], 128, 128, 8
        $region28: #{tpu_custom_call.1} parent=11 // pred_fallthru
          _
        // Predicated region
        $region29: #{tpu_custom_call.1} parent=11 // pred_check
          %p241 = pneg %p149
        $region30: #{tpu_custom_call.1} parent=11 // pred_check_branch
          %243 = sbr.rel (%p241) target = $region32
        $region31: #{tpu_custom_call.1} parent=11 // pred_region
          _
        $region32: #{tpu_custom_call.1} parent=11 // pred_fallthru
          _
        // Predicated region
        $region33: #{tpu_custom_call.1} parent=11 // pred_check
          %p244 = pneg %p170
        $region34: #{tpu_custom_call.1} parent=11 // pred_check_branch
          %246 = sbr.rel (%p244) target = $region36
        $region35: #{tpu_custom_call.1} parent=11 // pred_region
          _
        $region36: #{tpu_custom_call.1} parent=11 // pred_fallthru
          _
      $region12: #{tpu_custom_call.1} parent=5 // pred_fallthru
        _
      %p247 = scmp.lt.s32.totalorder %s18, 2
      // Predicated region
      $region37: #{tpu_custom_call.1} parent=5 // pred_check
        %p248 = pneg %p247
      $region38: #{tpu_custom_call.1} parent=5 // pred_check_branch
        %250 = sbr.rel (%p248) target = $region40
      $region39: #{tpu_custom_call.1} parent=5 // pred_region
        // Predicated region
        $region41: #{tpu_custom_call.1} parent=39 // pred_check
          %p251 = pneg %p38
        $region42: #{tpu_custom_call.1} parent=39 // pred_check_branch
          %253 = sbr.rel (%p251) target = $region44
        $region43: #{tpu_custom_call.1} parent=39 // pred_region
          %p254 = scmp.lt.s32.totalorder %s18, 1
          %s255 = scalar_select %p254, %s18, 1
          %s256 = smul.addr %s255, 8
          %s257 = scalar_lea.vmem %s0, %s256
        $region44: #{tpu_custom_call.1} parent=39 // pred_fallthru
          _
      $region40: #{tpu_custom_call.1} parent=5 // pred_fallthru
        _
      %p258 = scmp.le.s32.totalorder 1, %s18
      %p259 = scmp.lt.s32.totalorder %s18, 3
      %p260 = pnand %p258, %p259
      %p261 = pneg %p260
      // Predicated region
      $region45: #{tpu_custom_call.1} parent=5 // pred_check
        _
      $region46: #{tpu_custom_call.1} parent=5 // pred_check_branch
        %263 = sbr.rel (%p260) target = $region48
      $region47: #{tpu_custom_call.1} parent=5 // pred_region
        %s264 = ssub.s32 %s18, 1
        // Predicated region
        $region49: #{tpu_custom_call.1} parent=47 // pred_check
          %p265 = pneg %p86
        $region50: #{tpu_custom_call.1} parent=47 // pred_check_branch
          %267 = sbr.rel (%p265) target = $region52
        $region51: #{tpu_custom_call.1} parent=47 // pred_region
          %268 = dma.done [#allocation3], 128
        $region52: #{tpu_custom_call.1} parent=47 // pred_fallthru
          _
        // Predicated region
        $region53: #{tpu_custom_call.1} parent=47 // pred_check
          %p269 = pneg %p128
        $region54: #{tpu_custom_call.1} parent=47 // pred_check_branch
          %271 = sbr.rel (%p269) target = $region56
        $region55: #{tpu_custom_call.1} parent=47 // pred_region
          %272 = dma.done [#allocation6], 256
        $region56: #{tpu_custom_call.1} parent=47 // pred_fallthru
          _
        %p273 = scmp.lt.s32.totalorder %s23, 1
        %s274 = scalar_select %p273, %s23, 1
        %s275 = smul.addr %s274, 8
        %s276 = scalar_lea.vmem %s0, %s275
        %p277 = pneg %p44
        %p278 = pneg %p41
        %p279 = pneg %p65
        %p280 = pneg %p62
        %p281 = pneg %p86
        %p282 = pneg %p83
        %p283 = pneg %p107
        %p284 = pneg %p104
        %p285 = pneg %p128
        %p286 = pneg %p125
        %p287 = pneg %p149
        %p288 = pneg %p146
        %p289 = pneg %p170
        %p290 = pneg %p167
        %p291 = pneg %p196
        %p292 = pneg %p193
        %s293 = sand.u32 %s183, 1
        %s294 = scalar_lea.sflag [#allocation4], %s293
        %s295 = sand.u32 %s183, 1
        %s296 = smul.addr %s295, 8
        %s297 = scalar_lea.vmem [#allocation7], %s296
        %p298 = scmp.lt.s32.totalorder %s23, 1
        %s299 = scalar_select %p298, %s23, 1
        %s300 = smul.addr %s299, 8
        %s301 = scalar_lea.vmem %s0, %s300
        %v302 = vld [vmem:[%s1] sm:$0xff]
        %v303 = vld [vmem:[%s1 + $0x8] sm:$0xff]
        %v304 = vld [vmem:[#allocation2] sm:$0xff]
        %v305 = vld [vmem:[%s3] sm:$0xff]
        %v306 = vld [vmem:[%s3 + $0x8] sm:$0xff]
        %v307 = vld [vmem:[#allocation5] sm:$0xff]
        %v308 = vld [vmem:[#allocation5 + $0x8] sm:$0xff]
        %v309 = vld [vmem:[%s5] sm:$0x1]
        %v310 = vld [vmem:[%s6] sm:$0x1]
        %v311 = vld [vmem:[%s301] sm:$0xff]
        %vm312 = vcmask 64512
        %v314 = vsel %vm312, %v302, 0
        %v317 = vsel %vm312, %v303, 0
        %319 = vmatprep.subr.mxu0 0.0
        %320 = vmatpush1.msra.mxu0 %v311
        %321 = vmatprep.subr.mxu0 0.0
        %322 = vmatpush1.msra.mxu0 0.0
        %323 = vmatprep.subr.mxu0 0.0
        %324 = vmatpush1.msra.mxu0 0.0
        %325 = vmatprep.subr.mxu0 0.0
        %326 = vmatpush1.msra.mxu0 0.0
        %327 = vmatprep.subr.mxu0 0.0
        %328 = vmatpush1.msra.mxu0 0.0
        %329 = vmatprep.subr.mxu0 0.0
        %330 = vmatpush1.msra.mxu0 0.0
        %331 = vmatprep.subr.mxu0 0.0
        %332 = vmatpush1.msra.mxu0 0.0
        %333 = vmatprep.subr.mxu0 0.0
        %334 = vmatpush1.msra.mxu0 0.0
        %335 = vmatprep.subr.mxu0 0.0
        %336 = vmatpush1.msra.mxu0 0.0
        %337 = vmatprep.subr.mxu0 0.0
        %338 = vmatpush1.msra.mxu0 0.0
        %339 = vmatprep.subr.mxu0 0.0
        %340 = vmatpush1.msra.mxu0 0.0
        %341 = vmatprep.subr.mxu0 0.0
        %342 = vmatpush1.msra.mxu0 0.0
        %343 = vmatprep.subr.mxu0 0.0
        %344 = vmatpush1.msra.mxu0 0.0
        %345 = vmatprep.subr.mxu0 0.0
        %346 = vmatpush1.msra.mxu0 0.0
        %347 = vmatprep.subr.mxu0 0.0
        %348 = vmatpush1.msra.mxu0 0.0
        %349 = vmatprep.subr.mxu0 0.0
        %350 = vmatpush1.msra.mxu0 0.0
        %351 = vmatprep.subr.mxu0 0.0
        %352 = vmatpush1.msra.mxu0 0.0
        %353 = vmatprep.subr.mxu0 0.0
        %354 = vmatpush1.msra.mxu0 0.0
        %355 = vmatprep.subr.mxu0 0.0
        %356 = vmatpush1.msra.mxu0 0.0
        %357 = vmatprep.subr.mxu0 0.0
        %358 = vmatpush1.msra.mxu0 0.0
        %359 = vmatprep.subr.mxu0 0.0
        %360 = vmatpush1.msra.mxu0 0.0
        %361 = vmatprep.subr.mxu0 0.0
        %362 = vmatpush1.msra.mxu0 0.0
        %363 = vmatprep.subr.mxu0 0.0
        %364 = vmatpush1.msra.mxu0 0.0
        %365 = vmatprep.subr.mxu0 0.0
        %366 = vmatpush1.msra.mxu0 0.0
        %367 = vmatprep.subr.mxu0 0.0
        %368 = vmatpush1.msra.mxu0 0.0
        %369 = vmatprep.subr.mxu0 0.0
        %370 = vmatpush1.msra.mxu0 0.0
        %371 = vmatprep.subr.mxu0 0.0
        %372 = vmatpush1.msra.mxu0 0.0
        %373 = vmatprep.subr.mxu0 0.0
        %374 = vmatpush1.msra.mxu0 0.0
        %375 = vmatprep.subr.mxu0 0.0
        %376 = vmatpush1.msra.mxu0 0.0
        %377 = vmatprep.subr.mxu0 0.0
        %378 = vmatpush1.msra.mxu0 0.0
        %379 = vmatprep.subr.mxu0 0.0
        %380 = vmatpush1.msra.mxu0 0.0
        %381 = vmatprep.subr.mxu0 0.0
        %382 = vmatpush1.msra.mxu0 0.0
        %383 = vmatprep.mubr.f32.mxu0 0.0
        %384 = vmatmul.mubr.f32.gmra.mrb[0].mxu0 %v314
        %v385 = vpop.f32.mrb[0].mxu0
        %v386 = vadd.f32 0.0, %v385
        %v387 = vpop.f32.mrb[0].mxu0
        %388 = vmatprep.mubr.f32.mxu0 0.0
        %389 = vmatmul.mubr.f32.gmra.mrb[0].mxu0 %v317
        %v390 = vpop.f32.mrb[0].mxu0
        %v391 = vadd.f32 0.0, %v390
        %v392 = vpop.f32.mrb[0].mxu0
        %393 = vdwg.mxu0
        %v394 = vmul.f32 %v386, %v305
        %v395 = vmul.f32 %v391, %v306
        %v396 = vmul.f32 %v391, %v307
        %v397 = vmul.f32 %v386, %v308
        %v398 = vadd.f32 %v394, %v396
        %v399 = vadd.f32 %v395, %v397
        %vm400 = vcmask 130048
        %v402 = vsel %vm400, %v304, 0
        %404 = vmatprep.subr.mxu0 0.0
        %405 = vmatpush1.msra.mxu0 %v398
        %406 = vmatprep.subr.mxu0 0.0
        %407 = vmatpush1.msra.mxu0 %v399
        %408 = vmatprep.subr.mxu0 0.0
        %409 = vmatpush1.msra.mxu0 0.0
        %410 = vmatprep.subr.mxu0 0.0
        %411 = vmatpush1.msra.mxu0 0.0
        %412 = vmatprep.subr.mxu0 0.0
        %413 = vmatpush1.msra.mxu0 0.0
        %414 = vmatprep.subr.mxu0 0.0
        %415 = vmatpush1.msra.mxu0 0.0
        %416 = vmatprep.subr.mxu0 0.0
        %417 = vmatpush1.msra.mxu0 0.0
        %418 = vmatprep.subr.mxu0 0.0
        %419 = vmatpush1.msra.mxu0 0.0
        %420 = vmatprep.subr.mxu0 0.0
        %421 = vmatpush1.msra.mxu0 0.0
        %422 = vmatprep.subr.mxu0 0.0
        %423 = vmatpush1.msra.mxu0 0.0
        %424 = vmatprep.subr.mxu0 0.0
        %425 = vmatpush1.msra.mxu0 0.0
        %426 = vmatprep.subr.mxu0 0.0
        %427 = vmatpush1.msra.mxu0 0.0
        %428 = vmatprep.subr.mxu0 0.0
        %429 = vmatpush1.msra.mxu0 0.0
        %430 = vmatprep.subr.mxu0 0.0
        %431 = vmatpush1.msra.mxu0 0.0
        %432 = vmatprep.subr.mxu0 0.0
        %433 = vmatpush1.msra.mxu0 0.0
        %434 = vmatprep.subr.mxu0 0.0
        %435 = vmatpush1.msra.mxu0 0.0
        %436 = vmatprep.subr.mxu0 0.0
        %437 = vmatpush1.msra.mxu0 0.0
        %438 = vmatprep.subr.mxu0 0.0
        %439 = vmatpush1.msra.mxu0 0.0
        %440 = vmatprep.subr.mxu0 0.0
        %441 = vmatpush1.msra.mxu0 0.0
        %442 = vmatprep.subr.mxu0 0.0
        %443 = vmatpush1.msra.mxu0 0.0
        %444 = vmatprep.subr.mxu0 0.0
        %445 = vmatpush1.msra.mxu0 0.0
        %446 = vmatprep.subr.mxu0 0.0
        %447 = vmatpush1.msra.mxu0 0.0
        %448 = vmatprep.subr.mxu0 0.0
        %449 = vmatpush1.msra.mxu0 0.0
        %450 = vmatprep.subr.mxu0 0.0
        %451 = vmatpush1.msra.mxu0 0.0
        %452 = vmatprep.subr.mxu0 0.0
        %453 = vmatpush1.msra.mxu0 0.0
        %454 = vmatprep.subr.mxu0 0.0
        %455 = vmatpush1.msra.mxu0 0.0
        %456 = vmatprep.subr.mxu0 0.0
        %457 = vmatpush1.msra.mxu0 0.0
        %458 = vmatprep.subr.mxu0 0.0
        %459 = vmatpush1.msra.mxu0 0.0
        %460 = vmatprep.subr.mxu0 0.0
        %461 = vmatpush1.msra.mxu0 0.0
        %462 = vmatprep.subr.mxu0 0.0
        %463 = vmatpush1.msra.mxu0 0.0
        %464 = vmatprep.subr.mxu0 0.0
        %465 = vmatpush1.msra.mxu0 0.0
        %466 = vmatprep.subr.mxu0 0.0
        %467 = vmatpush1.msra.mxu0 0.0
        %468 = vmatprep.mubr.f32.mxu0 0.0
        %469 = vmatmul.mubr.f32.gmra.mrb[0].mxu0 %v402
        %v470 = vpop.f32.mrb[0].mxu0
        %v471 = vadd.f32 %v311, %v470
        %v472 = vpop.f32.mrb[0].mxu0
        %473 = vdwg.mxu0
        %vm474 = vcmask 261120
        %v475 = vsel %vm474, %v471, 0.0
        %476 = vadd.xlane.f32.xlu0 %v475
        %v477 = vpop.xlane.xlu0 %476
        %v478 = vmul.f32 %v477, 0.03125
        %v479 = vsub.f32 %v471, %v478
        %v480 = vmul.f32 %v479, %v479
        %v481 = vsel %vm474, %v480, 0.0
        %482 = vadd.xlane.f32.xlu0 %v481
        %v483 = vpop.xlane.xlu0 %482
        %v484 = vmul.f32 %v483, 0.03125
        %v485 = vadd.f32 %v484, 1e-12
        %v486 = vrsqrt.pop %v485
        %v487 = vmul.f32 %v479, %v486
        %v489 = vlaneseq
        %v490 = vshrl.u32 %v489, 7
        %v491 = vsub.s32 0, %v490
        %v492 = vrot.slane %v309, %v491
        %v494 = vmul.f32 %v487, %v492
        %v496 = vlaneseq
        %v497 = vshrl.u32 %v496, 7
        %v498 = vsub.s32 0, %v497
        %v499 = vrot.slane %v310, %v498
        %v501 = vadd.f32 %v494, %v499
        %502 = vst.msk [vmem:[%s297] sm:$0xff] %vm474, %v501
        %s503 = sand.u32 %s183, 1
        %s504 = scalar_lea.sflag [#allocation4], %s503
        %s505 = sand.u32 %s183, 1
        %s506 = smul.addr %s505, 8
        %s507 = scalar_lea.vmem [#allocation7], %s506
        // Predicated region
        $region57: #{tpu_custom_call.1} parent=47 // pred_check
          %p508 = pneg %p193
        $region58: #{tpu_custom_call.1} parent=47 // pred_check_branch
          %510 = sbr.rel (%p508) target = $region60
        $region59: #{tpu_custom_call.1} parent=47 // pred_region
          %s512 = ssub.s32 128, 128
          %513 = vsyncadd %s504, %s512
          %s514 = smul.addr %s23, 128
          %s515 = scalar_lea.hbm %s7, %s514
          %s517 = sshll.u32 %s507, 4
          %s518 = int_to_ptr.vmem [resolvable:$true] %s517
          %520 = dma.vmem_to_hbm [thread:$0]  %s518, 128, %s515, %s504
        $region60: #{tpu_custom_call.1} parent=47 // pred_fallthru
          _
      $region48: #{tpu_custom_call.1} parent=5 // pred_fallthru
        _
      %p521 = scmp.le.s32.totalorder 2, %s18
      // Predicated region
      $region61: #{tpu_custom_call.1} parent=5 // pred_check
        %p522 = pneg %p521
      $region62: #{tpu_custom_call.1} parent=5 // pred_check_branch
        %524 = sbr.rel (%p522) target = $region64
      $region63: #{tpu_custom_call.1} parent=5 // pred_region
        %s525 = ssub.s32 %s18, 2
        // Predicated region
        $region65: #{tpu_custom_call.1} parent=63 // pred_check
          %p526 = pneg %p199
        $region66: #{tpu_custom_call.1} parent=63 // pred_check_branch
          %528 = sbr.rel (%p526) target = $region68
        $region67: #{tpu_custom_call.1} parent=63 // pred_region
          %s529 = sand.u32 %s184, 1
          %s530 = scalar_lea.sflag [#allocation4], %s529
          %s531 = sand.u32 %s184, 1
          %s532 = smul.addr %s531, 8
          %s533 = scalar_lea.vmem [#allocation7], %s532
          %534 = dma.done %s530, 128
        $region68: #{tpu_custom_call.1} parent=63 // pred_fallthru
          _
      $region64: #{tpu_custom_call.1} parent=5 // pred_fallthru
        _
    $region6: #{tpu_custom_call.1} parent=1 // loop_footer
      %s22 = sadd.s32 1, %s18
    $region7: #{tpu_custom_call.1} parent=1 // loop_footer_branch
      %17 = sbr.rel target = $region3
    $region8: #{tpu_custom_call.1} parent=1 // loop_exit
      _
    %535 = vsyncpa [#allocation3], 1
    %s536 = scalar_lea.sflag [#allocation3], 1
    %537 = vsyncpa %s536, 1
    %538 = vsyncpa [#allocation6], 1
    %539 = vsyncpa [#allocation4], 1
    %s540 = scalar_lea.sflag [#allocation4], 1
    %541 = vsyncpa %s540, 1

</llo_original>
